<compile_context>
chip_gen: v5e
topology: v5e:2x2
jax: 0.10.0
libtpu: 0.0.40
codegen_flags: <defaults>
</compile_context>

<pallas_src>
from functools import partial

import jax
import jax.numpy as jnp
from jax import lax
from jax.experimental import pallas as pl
from jax.experimental.pallas import tpu as pltpu

_NEG_INF = float("-inf")


def temporal_attention_kernel(x_ref, w1t_ref, w2_ref, o_ref, sum_acc, max_acc, *,
                              inv_hw, lane, rem, rem_chunks):
    """One grid step = one (bn, C, hw_tile) spatial tile of a bn-sized batch block.

    x_ref   : (bn, C, hw_tile)  input tile (native NCHW layout, HW flattened)
    w1t_ref : (C, Cr)           fc1.weight transposed
    w2_ref  : (C, Cr)           fc2.weight (PyTorch layout)
    o_ref   : (1, bn, C)        sigmoid attention weights (lane-dense row per image)
    sum_acc : (bn, C, lane) f32 running per-channel partial sums   (VMEM scratch)
    max_acc : (bn, C, lane) f32 running per-channel partial maxima (VMEM scratch)
    """
    bn, C, hw_tile = x_ref.shape
    n_chunks = hw_tile // lane
    t = pl.program_id(1)
    last = pl.num_programs(1) - 1

    @pl.when(t == 0)
    def _init():
        sum_acc[...] = jnp.zeros(sum_acc.shape, sum_acc.dtype)
        max_acc[...] = jnp.full(max_acc.shape, _NEG_INF, max_acc.dtype)

    # --- chunked, VPU-only accumulation (no per-step cross-lane reduce) -------------------
    def _accum_chunk(k, valid_len):
        off = k * lane
        if not isinstance(k, int):
            off = pl.multiple_of(off, lane)
        chunk = x_ref[:, :, pl.ds(off, lane)].astype(jnp.float32)          # (bn, C, lane)
        if valid_len is None:
            sum_acc[...] = sum_acc[...] + chunk
            max_acc[...] = jnp.maximum(max_acc[...], chunk)
        else:
            pos = off + lax.broadcasted_iota(jnp.int32, chunk.shape, 2)
            ok = pos < valid_len
            sum_acc[...] = sum_acc[...] + jnp.where(ok, chunk, 0.0)
            max_acc[...] = jnp.maximum(max_acc[...], jnp.where(ok, chunk, _NEG_INF))

    def _accum_tile(num_chunks, valid_len):
        if num_chunks <= 8:
            for k in range(num_chunks):                   # short static loop -> unrolled
                _accum_chunk(k, valid_len)
        else:
            def body(k, carry):
                _accum_chunk(k, valid_len)
                return carry
            lax.fori_loop(0, num_chunks, body, 0)

    if rem == 0:
        _accum_tile(n_chunks, None)
    else:
        @pl.when(t != last)
        def _full_tile():
            _accum_tile(n_chunks, None)

        @pl.when(t == last)
        def _partial_tile():                              # masked remainder tile
            _accum_tile(rem_chunks, rem)

    # --- epilogue: one lane reduce + tiny shared MLP on the VPU ---------------------------
    @pl.when(t == last)
    def _epilogue():
        s = jnp.sum(sum_acc[...], axis=2)                 # (bn, C) global sum
        m = jnp.max(max_acc[...], axis=2)                 # (bn, C) global max
        avg = s * inv_hw                                  # global average pool

        w1t = w1t_ref[...]                                # (C, Cr)
        ha = jnp.maximum(jnp.sum(avg[:, :, None] * w1t[None, :, :], axis=1), 0.0)  # (bn, Cr)
        hm = jnp.maximum(jnp.sum(m[:, :, None] * w1t[None, :, :], axis=1), 0.0)    # (bn, Cr)
        h = ha + hm                                       # fc2 is linear: apply it once
        w2 = w2_ref[...]                                  # (C, Cr)
        logits = jnp.sum(h[:, None, :] * w2[None, :, :], axis=2)                   # (bn, C)

        o_ref[0] = 1.0 / (1.0 + jnp.exp(-logits))         # sigmoid


# ----------------------------------- tiling policy --------------------------------------
def _pick_hw_tile(hw, c, itemsize, tile_budget):
    """Full extent if it fits (or is tiny); otherwise the largest 128-multiple under budget."""
    if c * hw * itemsize <= tile_budget or hw <= 128:
        return hw
    cols = (tile_budget // (c * itemsize)) // 128 * 128
    cols = max(int(cols), 128)
    return hw if cols >= hw else cols


def _pick_batch_tile(n, c, cr, hw_tile, itemsize, tile_budget):
    """Largest divisor of N keeping the block under budget and epilogue temporaries small."""
    block_bytes = c * hw_tile * itemsize
    bn = 1
    for d in range(1, n + 1):
        if n % d != 0:
            continue
        if d * block_bytes > tile_budget:
            continue
        if d * c * cr * 4 > (1 << 20):        # bound (bn, C, Cr) epilogue temporaries
            continue
        bn = d
    return bn


def _pick_lane(hw_tile, bn, c, scratch_budget=2 << 20):
    """Accumulator lane width: bigger chunks amortize loop overhead, bounded by scratch."""
    if hw_tile % 128 != 0:
        return hw_tile                        # small / odd full-extent tile
    lane = 128
    for cand in (256, 512, 1024):
        if hw_tile % cand == 0 and 2 * bn * c * cand * 4 <= scratch_budget:
            lane = cand
    return lane


def temporal_attention_forward(x_nchw, w_fc1, w_fc2, *, hw_tile=None, batch_tile=None,
                               max_tile_bytes=8 * 1024 * 1024):
    """x_nchw: (N, C, H, W); w_fc1: (C//ratio, C); w_fc2: (C, C//ratio).
    Returns the sigmoid attention map of shape (N, C, 1, 1)."""
    N, C, H, W = x_nchw.shape
    Cr, C1 = w_fc1.shape
    assert C1 == C and w_fc2.shape == (C, Cr)
    HW = H * W

    x = x_nchw.reshape(N, C, HW)              # free reshape (row-major contiguous)
    w1t = jnp.transpose(w_fc1)                # (C, Cr) — tiny, done once in XLA
    itemsize = x.dtype.itemsize

    # Leave room in the streaming budget for the (double-buffered) weight blocks.
    w_bytes = 2 * C * Cr * jnp.dtype(w_fc1.dtype).itemsize
    tile_budget = max(1 << 20, max_tile_bytes - 2 * w_bytes)

    if hw_tile is None:
        hw_tile = _pick_hw_tile(HW, C, itemsize, tile_budget)
    assert hw_tile == HW or (hw_tile % 128 == 0 and hw_tile < HW), \
        "hw_tile must be the full H*W extent or a 128-multiple smaller than it"
    num_t = -(-HW // hw_tile)
    rem = HW % hw_tile

    if batch_tile is None:
        bn = _pick_batch_tile(N, C, Cr, hw_tile, itemsize, tile_budget)
    else:
        bn = int(batch_tile)
        assert N % bn == 0, "batch_tile must divide N"
    nb = N // bn

    lane = _pick_lane(hw_tile, bn, C)
    rem_chunks = (-(-rem // lane)) if rem else 0

    kernel = partial(temporal_attention_kernel, inv_hw=1.0 / float(HW),
                     lane=lane, rem=rem, rem_chunks=rem_chunks)

    block_bytes = bn * C * hw_tile * itemsize
    scratch_bytes = 2 * bn * C * lane * 4
    need = 2 * block_bytes + 2 * w_bytes + scratch_bytes + 2 * bn * C * 4 + (4 << 20)
    vmem_limit = int(min(56 << 20, max(16 << 20, need)))   # 56 MiB cap: safe on v7x's 64 MiB

    out = pl.pallas_call(
        kernel,
        out_shape=jax.ShapeDtypeStruct((nb, bn, C), jnp.float32),
        grid=(nb, num_t),
        in_specs=[
            pl.BlockSpec((bn, C, hw_tile), lambda n, t: (n, 0, t)),   # streamed input tile
            pl.BlockSpec((C, Cr), lambda n, t: (0, 0)),               # fc1 weight (transposed)
            pl.BlockSpec((C, Cr), lambda n, t: (0, 0)),               # fc2 weight
        ],
        out_specs=pl.BlockSpec((1, bn, C), lambda n, t: (n, 0, 0)),   # lane-dense rows
        scratch_shapes=[pltpu.VMEM((bn, C, lane), jnp.float32),       # running sums
                        pltpu.VMEM((bn, C, lane), jnp.float32)],      # running maxima
        compiler_params=pltpu.CompilerParams(
            dimension_semantics=("parallel", "arbitrary"),
            vmem_limit_bytes=vmem_limit),
    )(x, w1t, w_fc2)

    return out.reshape(N, C, 1, 1)


# --------------------------- pure-JAX reference (correctness check) ----------------------
def reference_forward(x, w_fc1, w_fc2):
    N, C, H, W = x.shape
    x32 = x.astype(jnp.float32)
    avg = jnp.mean(x32, axis=(2, 3))                      # (N, C)
    mx = jnp.max(x32, axis=(2, 3))                        # (N, C)
    hp = lax.Precision.HIGHEST

    def mlp(v):
        h = jnp.maximum(jnp.einsum("nc,rc->nr", v, w_fc1, precision=hp), 0.0)
        return jnp.einsum("nr,cr->nc", h, w_fc2, precision=hp)

    out = 1.0 / (1.0 + jnp.exp(-(mlp(avg) + mlp(mx))))
    return out.reshape(N, C, 1, 1)


if __name__ == "__main__":
    key = jax.random.PRNGKey(0)
    N, C, H, W = 2, 64, 16, 16
    ratio = 4
    Cr = C // ratio

    kx, k1, k2, kx2 = jax.random.split(key, 4)
    x = jax.random.normal(kx, (N, C, H, W), jnp.float32)
    # PyTorch Conv2d(C, Cr, 1, bias=False).weight.squeeze() -> (Cr, C); fc2 -> (C, Cr)
    w_fc1 = jax.random.normal(k1, (Cr, C), jnp.float32) / jnp.sqrt(float(C))
    w_fc2 = jax.random.normal(k2, (C, Cr), jnp.float32) / jnp.sqrt(float(Cr))

    ref = jax.block_until_ready(reference_forward(x, w_fc1, w_fc2))

    # Default policy (single spatial tile, batch-tiled).
    out = jax.block_until_ready(temporal_attention_forward(x, w_fc1, w_fc2))
    assert out.shape == (N, C, 1, 1), out.shape
    err = float(jnp.max(jnp.abs(out - ref)))
    assert err < 1e-4, f"max abs err (default) = {err}"

    # Multi spatial tile (exercises cross-tile sum/max accumulation in scratch).
    out2 = jax.block_until_ready(temporal_attention_forward(x, w_fc1, w_fc2, hw_tile=128))
    err2 = float(jnp.max(jnp.abs(out2 - ref)))
    assert err2 < 1e-4, f"max abs err (tiled) = {err2}"

    # Non-dividing spatial extent (exercises the masked remainder tile).
    x3 = jax.random.normal(kx2, (N, C, 20, 20), jnp.float32)
    ref3 = jax.block_until_ready(reference_forward(x3, w_fc1, w_fc2))
    out3 = jax.block_until_ready(temporal_attention_forward(x3, w_fc1, w_fc2, hw_tile=128))
    err3 = float(jnp.max(jnp.abs(out3 - ref3)))
    assert err3 < 1e-4, f"max abs err (masked remainder) = {err3}"

    # bn = 1 path (batch axis iterated on the grid).
    out4 = jax.block_until_ready(
        temporal_attention_forward(x, w_fc1, w_fc2, hw_tile=128, batch_tile=1))
    err4 = float(jnp.max(jnp.abs(out4 - ref)))
    assert err4 < 1e-4, f"max abs err (bn=1) = {err4}"

    print("KERNEL_OK")
</pallas_src>

<mosaic_0001>
module attributes {stable_mosaic.version = 11 : i64} {
  func.func @temporal_attention_kernel(%arg0: i32, %arg1: i32, %arg2: memref<2x64x256xf32, #tpu.memory_space<vmem>>, %arg3: memref<64x16xf32, #tpu.memory_space<vmem>>, %arg4: memref<64x16xf32, #tpu.memory_space<vmem>>, %arg5: memref<1x2x64xf32, #tpu.memory_space<vmem>>, %arg6: memref<2x64x256xf32, #tpu.memory_space<vmem>>, %arg7: memref<2x64x256xf32, #tpu.memory_space<vmem>>) attributes {dimension_semantics = [#tpu.dimension_semantics<parallel>, #tpu.dimension_semantics<arbitrary>], iteration_bounds = array<i64: 1, 1>, scalar_prefetch = 0 : i64, scratch_operands = 2 : i64, tpu.core_type = #tpu.core_type<tc>, window_params = [{transform_indices = @transform_0, window_bounds = array<i64: 2, 64, 256>}, {pipeline_mode = #tpu.pipeline_mode<synchronous>, transform_indices = @transform_1, window_bounds = array<i64: 64, 16>}, {pipeline_mode = #tpu.pipeline_mode<synchronous>, transform_indices = @transform_2, window_bounds = array<i64: 64, 16>}, {transform_indices = @transform_3, window_bounds = array<i64: 1, 2, 64>}]} {
    %c0_i32 = arith.constant 0 : i32
    %0 = arith.cmpi eq, %arg1, %c0_i32 : i32
    %1 = arith.extui %0 : i1 to i32
    %c0_i32_0 = arith.constant 0 : i32
    %2 = arith.cmpi ne, %1, %c0_i32_0 : i32
    scf.if %2 {
      %cst = arith.constant 0.000000e+00 : f32
      %13 = vector.broadcast %cst : f32 to vector<2x64x256xf32>
      %c0_17 = arith.constant 0 : index
      %c0_18 = arith.constant 0 : index
      %c0_19 = arith.constant 0 : index
      %14 = vector.load %arg6[%c0_17, %c0_18, %c0_19] : memref<2x64x256xf32, #tpu.memory_space<vmem>>, vector<2x64x256xf32>
      tpu.vector_store %arg6[%c0_17, %c0_18, %c0_19], %13 {strides = array<i32>} : memref<2x64x256xf32, #tpu.memory_space<vmem>>, vector<2x64x256xf32>,
      %cst_20 = arith.constant 0xFF800000 : f32
      %15 = vector.broadcast %cst_20 : f32 to vector<2x64x256xf32>
      %c0_21 = arith.constant 0 : index
      %c0_22 = arith.constant 0 : index
      %c0_23 = arith.constant 0 : index
      %16 = vector.load %arg7[%c0_21, %c0_22, %c0_23] : memref<2x64x256xf32, #tpu.memory_space<vmem>>, vector<2x64x256xf32>
      tpu.vector_store %arg7[%c0_21, %c0_22, %c0_23], %15 {strides = array<i32>} : memref<2x64x256xf32, #tpu.memory_space<vmem>>, vector<2x64x256xf32>,
    } else {
    }
    %c0 = arith.constant 0 : index
    %c0_1 = arith.constant 0 : index
    %c0_2 = arith.constant 0 : index
    %3 = vector.load %arg2[%c0, %c0_1, %c0_2] : memref<2x64x256xf32, #tpu.memory_space<vmem>>, vector<2x64x256xf32>
    %c0_3 = arith.constant 0 : index
    %c0_4 = arith.constant 0 : index
    %c0_5 = arith.constant 0 : index
    %4 = vector.load %arg6[%c0_3, %c0_4, %c0_5] : memref<2x64x256xf32, #tpu.memory_space<vmem>>, vector<2x64x256xf32>
    %5 = arith.addf %4, %3 : vector<2x64x256xf32>
    %c0_6 = arith.constant 0 : index
    %c0_7 = arith.constant 0 : index
    %c0_8 = arith.constant 0 : index
    %6 = vector.load %arg6[%c0_6, %c0_7, %c0_8] : memref<2x64x256xf32, #tpu.memory_space<vmem>>, vector<2x64x256xf32>
    tpu.vector_store %arg6[%c0_6, %c0_7, %c0_8], %5 {strides = array<i32>} : memref<2x64x256xf32, #tpu.memory_space<vmem>>, vector<2x64x256xf32>,
    %c0_9 = arith.constant 0 : index
    %c0_10 = arith.constant 0 : index
    %c0_11 = arith.constant 0 : index
    %7 = vector.load %arg7[%c0_9, %c0_10, %c0_11] : memref<2x64x256xf32, #tpu.memory_space<vmem>>, vector<2x64x256xf32>
    %8 = arith.maximumf %7, %3 : vector<2x64x256xf32>
    %c0_12 = arith.constant 0 : index
    %c0_13 = arith.constant 0 : index
    %c0_14 = arith.constant 0 : index
    %9 = vector.load %arg7[%c0_12, %c0_13, %c0_14] : memref<2x64x256xf32, #tpu.memory_space<vmem>>, vector<2x64x256xf32>
    tpu.vector_store %arg7[%c0_12, %c0_13, %c0_14], %8 {strides = array<i32>} : memref<2x64x256xf32, #tpu.memory_space<vmem>>, vector<2x64x256xf32>,
    %c0_i32_15 = arith.constant 0 : i32
    %10 = arith.cmpi eq, %arg1, %c0_i32_15 : i32
    %11 = arith.extui %10 : i1 to i32
    %c0_i32_16 = arith.constant 0 : i32
    %12 = arith.cmpi ne, %11, %c0_i32_16 : i32
    scf.if %12 {
      %c0_17 = arith.constant 0 : index
      %c0_18 = arith.constant 0 : index
      %c0_19 = arith.constant 0 : index
      %13 = vector.load %arg6[%c0_17, %c0_18, %c0_19] : memref<2x64x256xf32, #tpu.memory_space<vmem>>, vector<2x64x256xf32>
      %cst = arith.constant dense<0.000000e+00> : vector<2x64xf32>
      %14 = vector.multi_reduction <add>, %13, %cst [2] : vector<2x64x256xf32> to vector<2x64xf32>
      %c0_20 = arith.constant 0 : index
      %c0_21 = arith.constant 0 : index
      %c0_22 = arith.constant 0 : index
      %15 = vector.load %arg7[%c0_20, %c0_21, %c0_22] : memref<2x64x256xf32, #tpu.memory_space<vmem>>, vector<2x64x256xf32>
      %cst_23 = arith.constant dense<0xFF800000> : vector<2x64xf32>
      %16 = vector.multi_reduction <maximumf>, %15, %cst_23 [2] : vector<2x64x256xf32> to vector<2x64xf32>
      %cst_24 = arith.constant 3.906250e-03 : f32
      %17 = vector.broadcast %cst_24 : f32 to vector<2x64xf32>
      %18 = arith.mulf %14, %17 : vector<2x64xf32>
      %c0_25 = arith.constant 0 : index
      %c0_26 = arith.constant 0 : index
      %19 = vector.load %arg3[%c0_25, %c0_26] : memref<64x16xf32, #tpu.memory_space<vmem>>, vector<64x16xf32>
      %20 = vector.shape_cast %18 : vector<2x64xf32> to vector<2x64x1xf32>
      %21 = vector.shape_cast %19 : vector<64x16xf32> to vector<1x64x16xf32>
      %22 = vector.broadcast %20 : vector<2x64x1xf32> to vector<2x64x16xf32>
      %23 = vector.broadcast %21 : vector<1x64x16xf32> to vector<2x64x16xf32>
      %24 = arith.mulf %22, %23 : vector<2x64x16xf32>
      %cst_27 = arith.constant dense<0.000000e+00> : vector<2x16xf32>
      %25 = vector.multi_reduction <add>, %24, %cst_27 [1] : vector<2x64x16xf32> to vector<2x16xf32>
      %cst_28 = arith.constant 0.000000e+00 : f32
      %26 = vector.broadcast %cst_28 : f32 to vector<2x16xf32>
      %27 = arith.maximumf %25, %26 : vector<2x16xf32>
      %28 = vector.shape_cast %16 : vector<2x64xf32> to vector<2x64x1xf32>
      %29 = vector.shape_cast %19 : vector<64x16xf32> to vector<1x64x16xf32>
      %30 = vector.broadcast %28 : vector<2x64x1xf32> to vector<2x64x16xf32>
      %31 = vector.broadcast %29 : vector<1x64x16xf32> to vector<2x64x16xf32>
      %32 = arith.mulf %30, %31 : vector<2x64x16xf32>
      %cst_29 = arith.constant dense<0.000000e+00> : vector<2x16xf32>
      %33 = vector.multi_reduction <add>, %32, %cst_29 [1] : vector<2x64x16xf32> to vector<2x16xf32>
      %cst_30 = arith.constant 0.000000e+00 : f32
      %34 = vector.broadcast %cst_30 : f32 to vector<2x16xf32>
      %35 = arith.maximumf %33, %34 : vector<2x16xf32>
      %36 = arith.addf %27, %35 : vector<2x16xf32>
      %c0_31 = arith.constant 0 : index
      %c0_32 = arith.constant 0 : index
      %37 = vector.load %arg4[%c0_31, %c0_32] : memref<64x16xf32, #tpu.memory_space<vmem>>, vector<64x16xf32>
      %38 = vector.shape_cast %36 : vector<2x16xf32> to vector<2x1x16xf32>
      %39 = vector.shape_cast %37 : vector<64x16xf32> to vector<1x64x16xf32>
      %40 = vector.broadcast %38 : vector<2x1x16xf32> to vector<2x64x16xf32>
      %41 = vector.broadcast %39 : vector<1x64x16xf32> to vector<2x64x16xf32>
      %42 = arith.mulf %40, %41 : vector<2x64x16xf32>
      %cst_33 = arith.constant dense<0.000000e+00> : vector<2x64xf32>
      %43 = vector.multi_reduction <add>, %42, %cst_33 [2] : vector<2x64x16xf32> to vector<2x64xf32>
      %cst_34 = arith.constant 0.000000e+00 : f32
      %44 = vector.broadcast %cst_34 : f32 to vector<2x64xf32>
      %45 = arith.subf %44, %43 : vector<2x64xf32>
      %46 = math.exp %45 : vector<2x64xf32>
      %cst_35 = arith.constant 1.000000e+00 : f32
      %47 = vector.broadcast %cst_35 : f32 to vector<2x64xf32>
      %48 = arith.addf %47, %46 : vector<2x64xf32>
      %cst_36 = arith.constant 1.000000e+00 : f32
      %49 = vector.broadcast %cst_36 : f32 to vector<2x64xf32>
      %50 = arith.divf %49, %48 : vector<2x64xf32>
      %c0_37 = arith.constant 0 : index
      %c0_38 = arith.constant 0 : index
      %c0_39 = arith.constant 0 : index
      %51 = vector.load %arg5[%c0_37, %c0_38, %c0_39] : memref<1x2x64xf32, #tpu.memory_space<vmem>>, vector<1x2x64xf32>
      %52 = vector.shape_cast %51 : vector<1x2x64xf32> to vector<2x64xf32>
      %53 = vector.shape_cast %50 : vector<2x64xf32> to vector<1x2x64xf32>
      tpu.vector_store %arg5[%c0_37, %c0_38, %c0_39], %53 {strides = array<i32>} : memref<1x2x64xf32, #tpu.memory_space<vmem>>, vector<1x2x64xf32>,
    } else {
    }
    return
  }
  func.func @transform_0(%arg0: i32, %arg1: i32) -> (i32, i32, i32) {
    %c0_i32 = arith.constant 0 : i32
    %c0_i32_0 = arith.constant 0 : i32
    return %arg0, %c0_i32, %arg1 : i32, i32, i32
  }
  func.func @transform_1(%arg0: i32, %arg1: i32) -> (i32, i32) {
    %c0_i32 = arith.constant 0 : i32
    %c0_i32_0 = arith.constant 0 : i32
    %c0_i32_1 = arith.constant 0 : i32
    return %c0_i32, %c0_i32_0 : i32, i32
  }
  func.func @transform_2(%arg0: i32, %arg1: i32) -> (i32, i32) {
    %c0_i32 = arith.constant 0 : i32
    %c0_i32_0 = arith.constant 0 : i32
    %c0_i32_1 = arith.constant 0 : i32
    return %c0_i32, %c0_i32_0 : i32, i32
  }
  func.func @transform_3(%arg0: i32, %arg1: i32) -> (i32, i32, i32) {
    %c0_i32 = arith.constant 0 : i32
    %c0_i32_0 = arith.constant 0 : i32
    %c0_i32_1 = arith.constant 0 : i32
    return %arg0, %c0_i32, %c0_i32_0 : i32, i32, i32
  }
}

</mosaic_0001>

<llo_original>
// kernel: tpu_custom_call.1
$region0: #{tpu_custom_call.1}
  #allocation0 [shape = 'u32[]', space=smem, size = 0x4, offset = 0x4, fixed_abs, tag = 'smem constant byte address 0x4 - core index']
  #allocation1 [shape = 'u32[72,128]{1,0:T(1,128)}', space=vmem, size = 0x9000, scoped, tag = 'internal scratch']
  #allocation2 [shape = 'f32[2,64,256]{2,1,0:T(8,128)}', space=vmem, size = 0x20000, scoped, tag = 'scratch operand']
  #allocation3 [shape = 'f32[2,64,256]{2,1,0:T(8,128)}', space=vmem, size = 0x20000, scoped, tag = 'scratch operand']
  %s0 = inlined_call_operand.hbm [shape: f32[2,64,256], index: 0, kind: input, shape index: {}]
  %s1 = inlined_call_operand.vmem [shape: f32[64,16], index: 1, kind: input, shape index: {}]
  %s2 = inlined_call_operand.vmem [shape: f32[64,16], index: 2, kind: input, shape index: {}]
  %s3 = inlined_call_operand.hbm [shape: f32[1,2,64], index: 3, kind: output, shape index: {}]
  %s4 = sld [smem:[#allocation0]]
  $region34: #{tpu_custom_call.1} parent=0
    _
  %s6 = ssub.s32 1, %s4
  %s7 = scalar_select 0, %s6, %s4
  $region1: #{tpu_custom_call.1} parent=0
    #allocation4 [shape = 'u8[131072]{0}', space=vmem, size = 0x20000, scoped, tag = 'input window, operand 0, single buffered']
    #allocation5 [shape = 's32[1]{0}', space=sflag, size = 0x4, scoped, tag = 'scoped memory for tpu_custom_call.1']
    #allocation6 [shape = 's32[1]{0}', space=sflag, size = 0x4, scoped, tag = 'scoped memory for tpu_custom_call.1']
    #allocation7 [shape = 'u8[1024]{0}', space=vmem, size = 0x400, scoped, tag = 'output window, operand 0, single buffered']
    %8 = vsyncpa [#allocation5], 0
    %9 = vsyncpa [#allocation6], 0
    // Predicated region
    $region2: #{tpu_custom_call.1} parent=1 // pred_check
      _
    $region3: #{tpu_custom_call.1} parent=1 // pred_check_branch
      %11 = sbr.rel (0) target = $region5
    $region4: #{tpu_custom_call.1} parent=1 // pred_region
      %13 = vsyncadd [#allocation5], 0
      %s14 = sshll.u32 %s0, 4
      %s15 = int_to_ptr.hbm [resolvable:$true] %s14
      %s16 = sshll.u32 [#allocation4], 4
      %s17 = int_to_ptr.vmem [resolvable:$true] %s16
      %22 = dma.hbm_to_vmem [thread:$0]  %s15, 4096, %s17, [#allocation5], 256, 256, 16
    $region5: #{tpu_custom_call.1} parent=1 // pred_fallthru
      _
    // Predicated region
    $region6: #{tpu_custom_call.1} parent=1 // pred_check
      _
    $region7: #{tpu_custom_call.1} parent=1 // pred_check_branch
      %24 = sbr.rel (0) target = $region9
    $region8: #{tpu_custom_call.1} parent=1 // pred_region
      _
    $region9: #{tpu_custom_call.1} parent=1 // pred_fallthru
      _
    // Predicated region
    $region10: #{tpu_custom_call.1} parent=1 // pred_check
      _
    $region11: #{tpu_custom_call.1} parent=1 // pred_check_branch
      %26 = sbr.rel (0) target = $region13
    $region12: #{tpu_custom_call.1} parent=1 // pred_region
      _
    $region13: #{tpu_custom_call.1} parent=1 // pred_fallthru
      _
    // Predicated region
    $region14: #{tpu_custom_call.1} parent=1 // pred_check
      _
    $region15: #{tpu_custom_call.1} parent=1 // pred_check_branch
      %28 = sbr.rel (0) target = $region17
    $region16: #{tpu_custom_call.1} parent=1 // pred_region
      %30 = dma.done [#allocation5], 4096
    $region17: #{tpu_custom_call.1} parent=1 // pred_fallthru
      _
    %p31 = scmp.eq.s32.totalorder 0, 0
    // Predicated region
    $region18: #{tpu_custom_call.1} parent=1 // pred_check
      %p32 = pneg %p31
    $region19: #{tpu_custom_call.1} parent=1 // pred_check_branch
      %34 = sbr.rel (%p32) target = $region21
    $region20: #{tpu_custom_call.1} parent=1 // pred_region
      %35 = vst [vmem:[#allocation2] sm:$0xff] 0.0
      %36 = vst [vmem:[#allocation2 + $0x8] sm:$0xff] 0.0
      %37 = vst [vmem:[#allocation2 + $0x10] sm:$0xff] 0.0
      %38 = vst [vmem:[#allocation2 + $0x18] sm:$0xff] 0.0
      %39 = vst [vmem:[#allocation2 + $0x20] sm:$0xff] 0.0
      %40 = vst [vmem:[#allocation2 + $0x28] sm:$0xff] 0.0
      %41 = vst [vmem:[#allocation2 + $0x30] sm:$0xff] 0.0
      %42 = vst [vmem:[#allocation2 + $0x38] sm:$0xff] 0.0
      %43 = vst [vmem:[#allocation2 + $0x40] sm:$0xff] 0.0
      %44 = vst [vmem:[#allocation2 + $0x48] sm:$0xff] 0.0
      %45 = vst [vmem:[#allocation2 + $0x50] sm:$0xff] 0.0
      %46 = vst [vmem:[#allocation2 + $0x58] sm:$0xff] 0.0
      %47 = vst [vmem:[#allocation2 + $0x60] sm:$0xff] 0.0
      %48 = vst [vmem:[#allocation2 + $0x68] sm:$0xff] 0.0
      %49 = vst [vmem:[#allocation2 + $0x70] sm:$0xff] 0.0
      %50 = vst [vmem:[#allocation2 + $0x78] sm:$0xff] 0.0
      %51 = vst [vmem:[#allocation2 + $0x80] sm:$0xff] 0.0
      %52 = vst [vmem:[#allocation2 + $0x88] sm:$0xff] 0.0
      %53 = vst [vmem:[#allocation2 + $0x90] sm:$0xff] 0.0
      %54 = vst [vmem:[#allocation2 + $0x98] sm:$0xff] 0.0
      %55 = vst [vmem:[#allocation2 + $0xa0] sm:$0xff] 0.0
      %56 = vst [vmem:[#allocation2 + $0xa8] sm:$0xff] 0.0
      %57 = vst [vmem:[#allocation2 + $0xb0] sm:$0xff] 0.0
      %58 = vst [vmem:[#allocation2 + $0xb8] sm:$0xff] 0.0
      %59 = vst [vmem:[#allocation2 + $0xc0] sm:$0xff] 0.0
      %60 = vst [vmem:[#allocation2 + $0xc8] sm:$0xff] 0.0
      %61 = vst [vmem:[#allocation2 + $0xd0] sm:$0xff] 0.0
      %62 = vst [vmem:[#allocation2 + $0xd8] sm:$0xff] 0.0
      %63 = vst [vmem:[#allocation2 + $0xe0] sm:$0xff] 0.0
      %64 = vst [vmem:[#allocation2 + $0xe8] sm:$0xff] 0.0
      %65 = vst [vmem:[#allocation2 + $0xf0] sm:$0xff] 0.0
      %66 = vst [vmem:[#allocation2 + $0xf8] sm:$0xff] 0.0
      %67 = vst [vmem:[#allocation3] sm:$0xff] -inf
      %68 = vst [vmem:[#allocation3 + $0x8] sm:$0xff] -inf
      %69 = vst [vmem:[#allocation3 + $0x10] sm:$0xff] -inf
      %70 = vst [vmem:[#allocation3 + $0x18] sm:$0xff] -inf
      %71 = vst [vmem:[#allocation3 + $0x20] sm:$0xff] -inf
      %72 = vst [vmem:[#allocation3 + $0x28] sm:$0xff] -inf
      %73 = vst [vmem:[#allocation3 + $0x30] sm:$0xff] -inf
      %74 = vst [vmem:[#allocation3 + $0x38] sm:$0xff] -inf
      %75 = vst [vmem:[#allocation3 + $0x40] sm:$0xff] -inf
      %76 = vst [vmem:[#allocation3 + $0x48] sm:$0xff] -inf
      %77 = vst [vmem:[#allocation3 + $0x50] sm:$0xff] -inf
      %78 = vst [vmem:[#allocation3 + $0x58] sm:$0xff] -inf
      %79 = vst [vmem:[#allocation3 + $0x60] sm:$0xff] -inf
      %80 = vst [vmem:[#allocation3 + $0x68] sm:$0xff] -inf
      %81 = vst [vmem:[#allocation3 + $0x70] sm:$0xff] -inf
      %82 = vst [vmem:[#allocation3 + $0x78] sm:$0xff] -inf
      %83 = vst [vmem:[#allocation3 + $0x80] sm:$0xff] -inf
      %84 = vst [vmem:[#allocation3 + $0x88] sm:$0xff] -inf
      %85 = vst [vmem:[#allocation3 + $0x90] sm:$0xff] -inf
      %86 = vst [vmem:[#allocation3 + $0x98] sm:$0xff] -inf
      %87 = vst [vmem:[#allocation3 + $0xa0] sm:$0xff] -inf
      %88 = vst [vmem:[#allocation3 + $0xa8] sm:$0xff] -inf
      %89 = vst [vmem:[#allocation3 + $0xb0] sm:$0xff] -inf
      %90 = vst [vmem:[#allocation3 + $0xb8] sm:$0xff] -inf
      %91 = vst [vmem:[#allocation3 + $0xc0] sm:$0xff] -inf
      %92 = vst [vmem:[#allocation3 + $0xc8] sm:$0xff] -inf
      %93 = vst [vmem:[#allocation3 + $0xd0] sm:$0xff] -inf
      %94 = vst [vmem:[#allocation3 + $0xd8] sm:$0xff] -inf
      %95 = vst [vmem:[#allocation3 + $0xe0] sm:$0xff] -inf
      %96 = vst [vmem:[#allocation3 + $0xe8] sm:$0xff] -inf
      %97 = vst [vmem:[#allocation3 + $0xf0] sm:$0xff] -inf
      %98 = vst [vmem:[#allocation3 + $0xf8] sm:$0xff] -inf
    $region21: #{tpu_custom_call.1} parent=1 // pred_fallthru
      _
    %v99 = vld [vmem:[#allocation4] sm:$0xff]
    %v100 = vld [vmem:[#allocation4 + $0x8] sm:$0xff]
    %v101 = vld [vmem:[#allocation4 + $0x10] sm:$0xff]
    %v102 = vld [vmem:[#allocation4 + $0x18] sm:$0xff]
    %v103 = vld [vmem:[#allocation4 + $0x20] sm:$0xff]
    %v104 = vld [vmem:[#allocation4 + $0x28] sm:$0xff]
    %v105 = vld [vmem:[#allocation4 + $0x30] sm:$0xff]
    %v106 = vld [vmem:[#allocation4 + $0x38] sm:$0xff]
    %v107 = vld [vmem:[#allocation4 + $0x40] sm:$0xff]
    %v108 = vld [vmem:[#allocation4 + $0x48] sm:$0xff]
    %v109 = vld [vmem:[#allocation4 + $0x50] sm:$0xff]
    %v110 = vld [vmem:[#allocation4 + $0x58] sm:$0xff]
    %v111 = vld [vmem:[#allocation4 + $0x60] sm:$0xff]
    %v112 = vld [vmem:[#allocation4 + $0x68] sm:$0xff]
    %v113 = vld [vmem:[#allocation4 + $0x70] sm:$0xff]
    %v114 = vld [vmem:[#allocation4 + $0x78] sm:$0xff]
    %v115 = vld [vmem:[#allocation4 + $0x80] sm:$0xff]
    %v116 = vld [vmem:[#allocation4 + $0x88] sm:$0xff]
    %v117 = vld [vmem:[#allocation4 + $0x90] sm:$0xff]
    %v118 = vld [vmem:[#allocation4 + $0x98] sm:$0xff]
    %v119 = vld [vmem:[#allocation4 + $0xa0] sm:$0xff]
    %v120 = vld [vmem:[#allocation4 + $0xa8] sm:$0xff]
    %v121 = vld [vmem:[#allocation4 + $0xb0] sm:$0xff]
    %v122 = vld [vmem:[#allocation4 + $0xb8] sm:$0xff]
    %v123 = vld [vmem:[#allocation4 + $0xc0] sm:$0xff]
    %v124 = vld [vmem:[#allocation4 + $0xc8] sm:$0xff]
    %v125 = vld [vmem:[#allocation4 + $0xd0] sm:$0xff]
    %v126 = vld [vmem:[#allocation4 + $0xd8] sm:$0xff]
    %v127 = vld [vmem:[#allocation4 + $0xe0] sm:$0xff]
    %v128 = vld [vmem:[#allocation4 + $0xe8] sm:$0xff]
    %v129 = vld [vmem:[#allocation4 + $0xf0] sm:$0xff]
    %v130 = vld [vmem:[#allocation4 + $0xf8] sm:$0xff]
    %v131 = vld [vmem:[#allocation2] sm:$0xff]
    %v132 = vld [vmem:[#allocation2 + $0x8] sm:$0xff]
    %v133 = vld [vmem:[#allocation2 + $0x10] sm:$0xff]
    %v134 = vld [vmem:[#allocation2 + $0x18] sm:$0xff]
    %v135 = vld [vmem:[#allocation2 + $0x20] sm:$0xff]
    %v136 = vld [vmem:[#allocation2 + $0x28] sm:$0xff]
    %v137 = vld [vmem:[#allocation2 + $0x30] sm:$0xff]
    %v138 = vld [vmem:[#allocation2 + $0x38] sm:$0xff]
    %v139 = vld [vmem:[#allocation2 + $0x40] sm:$0xff]
    %v140 = vld [vmem:[#allocation2 + $0x48] sm:$0xff]
    %v141 = vld [vmem:[#allocation2 + $0x50] sm:$0xff]
    %v142 = vld [vmem:[#allocation2 + $0x58] sm:$0xff]
    %v143 = vld [vmem:[#allocation2 + $0x60] sm:$0xff]
    %v144 = vld [vmem:[#allocation2 + $0x68] sm:$0xff]
    %v145 = vld [vmem:[#allocation2 + $0x70] sm:$0xff]
    %v146 = vld [vmem:[#allocation2 + $0x78] sm:$0xff]
    %v147 = vld [vmem:[#allocation2 + $0x80] sm:$0xff]
    %v148 = vld [vmem:[#allocation2 + $0x88] sm:$0xff]
    %v149 = vld [vmem:[#allocation2 + $0x90] sm:$0xff]
    %v150 = vld [vmem:[#allocation2 + $0x98] sm:$0xff]
    %v151 = vld [vmem:[#allocation2 + $0xa0] sm:$0xff]
    %v152 = vld [vmem:[#allocation2 + $0xa8] sm:$0xff]
    %v153 = vld [vmem:[#allocation2 + $0xb0] sm:$0xff]
    %v154 = vld [vmem:[#allocation2 + $0xb8] sm:$0xff]
    %v155 = vld [vmem:[#allocation2 + $0xc0] sm:$0xff]
    %v156 = vld [vmem:[#allocation2 + $0xc8] sm:$0xff]
    %v157 = vld [vmem:[#allocation2 + $0xd0] sm:$0xff]
    %v158 = vld [vmem:[#allocation2 + $0xd8] sm:$0xff]
    %v159 = vld [vmem:[#allocation2 + $0xe0] sm:$0xff]
    %v160 = vld [vmem:[#allocation2 + $0xe8] sm:$0xff]
    %v161 = vld [vmem:[#allocation2 + $0xf0] sm:$0xff]
    %v162 = vld [vmem:[#allocation2 + $0xf8] sm:$0xff]
    %v163 = vadd.f32 %v131, %v99
    %v164 = vadd.f32 %v132, %v100
    %v165 = vadd.f32 %v133, %v101
    %v166 = vadd.f32 %v134, %v102
    %v167 = vadd.f32 %v135, %v103
    %v168 = vadd.f32 %v136, %v104
    %v169 = vadd.f32 %v137, %v105
    %v170 = vadd.f32 %v138, %v106
    %v171 = vadd.f32 %v139, %v107
    %v172 = vadd.f32 %v140, %v108
    %v173 = vadd.f32 %v141, %v109
    %v174 = vadd.f32 %v142, %v110
    %v175 = vadd.f32 %v143, %v111
    %v176 = vadd.f32 %v144, %v112
    %v177 = vadd.f32 %v145, %v113
    %v178 = vadd.f32 %v146, %v114
    %v179 = vadd.f32 %v147, %v115
    %v180 = vadd.f32 %v148, %v116
    %v181 = vadd.f32 %v149, %v117
    %v182 = vadd.f32 %v150, %v118
    %v183 = vadd.f32 %v151, %v119
    %v184 = vadd.f32 %v152, %v120
    %v185 = vadd.f32 %v153, %v121
    %v186 = vadd.f32 %v154, %v122
    %v187 = vadd.f32 %v155, %v123
    %v188 = vadd.f32 %v156, %v124
    %v189 = vadd.f32 %v157, %v125
    %v190 = vadd.f32 %v158, %v126
    %v191 = vadd.f32 %v159, %v127
    %v192 = vadd.f32 %v160, %v128
    %v193 = vadd.f32 %v161, %v129
    %v194 = vadd.f32 %v162, %v130
    %195 = vst [vmem:[#allocation2] sm:$0xff] %v163
    %196 = vst [vmem:[#allocation2 + $0x8] sm:$0xff] %v164
    %197 = vst [vmem:[#allocation2 + $0x10] sm:$0xff] %v165
    %198 = vst [vmem:[#allocation2 + $0x18] sm:$0xff] %v166
    %199 = vst [vmem:[#allocation2 + $0x20] sm:$0xff] %v167
    %200 = vst [vmem:[#allocation2 + $0x28] sm:$0xff] %v168
    %201 = vst [vmem:[#allocation2 + $0x30] sm:$0xff] %v169
    %202 = vst [vmem:[#allocation2 + $0x38] sm:$0xff] %v170
    %203 = vst [vmem:[#allocation2 + $0x40] sm:$0xff] %v171
    %204 = vst [vmem:[#allocation2 + $0x48] sm:$0xff] %v172
    %205 = vst [vmem:[#allocation2 + $0x50] sm:$0xff] %v173
    %206 = vst [vmem:[#allocation2 + $0x58] sm:$0xff] %v174
    %207 = vst [vmem:[#allocation2 + $0x60] sm:$0xff] %v175
    %208 = vst [vmem:[#allocation2 + $0x68] sm:$0xff] %v176
    %209 = vst [vmem:[#allocation2 + $0x70] sm:$0xff] %v177
    %210 = vst [vmem:[#allocation2 + $0x78] sm:$0xff] %v178
    %211 = vst [vmem:[#allocation2 + $0x80] sm:$0xff] %v179
    %212 = vst [vmem:[#allocation2 + $0x88] sm:$0xff] %v180
    %213 = vst [vmem:[#allocation2 + $0x90] sm:$0xff] %v181
    %214 = vst [vmem:[#allocation2 + $0x98] sm:$0xff] %v182
    %215 = vst [vmem:[#allocation2 + $0xa0] sm:$0xff] %v183
    %216 = vst [vmem:[#allocation2 + $0xa8] sm:$0xff] %v184
    %217 = vst [vmem:[#allocation2 + $0xb0] sm:$0xff] %v185
    %218 = vst [vmem:[#allocation2 + $0xb8] sm:$0xff] %v186
    %219 = vst [vmem:[#allocation2 + $0xc0] sm:$0xff] %v187
    %220 = vst [vmem:[#allocation2 + $0xc8] sm:$0xff] %v188
    %221 = vst [vmem:[#allocation2 + $0xd0] sm:$0xff] %v189
    %222 = vst [vmem:[#allocation2 + $0xd8] sm:$0xff] %v190
    %223 = vst [vmem:[#allocation2 + $0xe0] sm:$0xff] %v191
    %224 = vst [vmem:[#allocation2 + $0xe8] sm:$0xff] %v192
    %225 = vst [vmem:[#allocation2 + $0xf0] sm:$0xff] %v193
    %226 = vst [vmem:[#allocation2 + $0xf8] sm:$0xff] %v194
    %v227 = vld [vmem:[#allocation3] sm:$0xff]
    %v228 = vld [vmem:[#allocation3 + $0x8] sm:$0xff]
    %v229 = vld [vmem:[#allocation3 + $0x10] sm:$0xff]
    %v230 = vld [vmem:[#allocation3 + $0x18] sm:$0xff]
    %v231 = vld [vmem:[#allocation3 + $0x20] sm:$0xff]
    %v232 = vld [vmem:[#allocation3 + $0x28] sm:$0xff]
    %v233 = vld [vmem:[#allocation3 + $0x30] sm:$0xff]
    %v234 = vld [vmem:[#allocation3 + $0x38] sm:$0xff]
    %v235 = vld [vmem:[#allocation3 + $0x40] sm:$0xff]
    %v236 = vld [vmem:[#allocation3 + $0x48] sm:$0xff]
    %v237 = vld [vmem:[#allocation3 + $0x50] sm:$0xff]
    %v238 = vld [vmem:[#allocation3 + $0x58] sm:$0xff]
    %v239 = vld [vmem:[#allocation3 + $0x60] sm:$0xff]
    %v240 = vld [vmem:[#allocation3 + $0x68] sm:$0xff]
    %v241 = vld [vmem:[#allocation3 + $0x70] sm:$0xff]
    %v242 = vld [vmem:[#allocation3 + $0x78] sm:$0xff]
    %v243 = vld [vmem:[#allocation3 + $0x80] sm:$0xff]
    %v244 = vld [vmem:[#allocation3 + $0x88] sm:$0xff]
    %v245 = vld [vmem:[#allocation3 + $0x90] sm:$0xff]
    %v246 = vld [vmem:[#allocation3 + $0x98] sm:$0xff]
    %v247 = vld [vmem:[#allocation3 + $0xa0] sm:$0xff]
    %v248 = vld [vmem:[#allocation3 + $0xa8] sm:$0xff]
    %v249 = vld [vmem:[#allocation3 + $0xb0] sm:$0xff]
    %v250 = vld [vmem:[#allocation3 + $0xb8] sm:$0xff]
    %v251 = vld [vmem:[#allocation3 + $0xc0] sm:$0xff]
    %v252 = vld [vmem:[#allocation3 + $0xc8] sm:$0xff]
    %v253 = vld [vmem:[#allocation3 + $0xd0] sm:$0xff]
    %v254 = vld [vmem:[#allocation3 + $0xd8] sm:$0xff]
    %v255 = vld [vmem:[#allocation3 + $0xe0] sm:$0xff]
    %v256 = vld [vmem:[#allocation3 + $0xe8] sm:$0xff]
    %v257 = vld [vmem:[#allocation3 + $0xf0] sm:$0xff]
    %v258 = vld [vmem:[#allocation3 + $0xf8] sm:$0xff]
    %v259 = vmax.f32 %v227, %v99
    %v260 = vmax.f32 %v228, %v100
    %v261 = vmax.f32 %v229, %v101
    %v262 = vmax.f32 %v230, %v102
    %v263 = vmax.f32 %v231, %v103
    %v264 = vmax.f32 %v232, %v104
    %v265 = vmax.f32 %v233, %v105
    %v266 = vmax.f32 %v234, %v106
    %v267 = vmax.f32 %v235, %v107
    %v268 = vmax.f32 %v236, %v108
    %v269 = vmax.f32 %v237, %v109
    %v270 = vmax.f32 %v238, %v110
    %v271 = vmax.f32 %v239, %v111
    %v272 = vmax.f32 %v240, %v112
    %v273 = vmax.f32 %v241, %v113
    %v274 = vmax.f32 %v242, %v114
    %v275 = vmax.f32 %v243, %v115
    %v276 = vmax.f32 %v244, %v116
    %v277 = vmax.f32 %v245, %v117
    %v278 = vmax.f32 %v246, %v118
    %v279 = vmax.f32 %v247, %v119
    %v280 = vmax.f32 %v248, %v120
    %v281 = vmax.f32 %v249, %v121
    %v282 = vmax.f32 %v250, %v122
    %v283 = vmax.f32 %v251, %v123
    %v284 = vmax.f32 %v252, %v124
    %v285 = vmax.f32 %v253, %v125
    %v286 = vmax.f32 %v254, %v126
    %v287 = vmax.f32 %v255, %v127
    %v288 = vmax.f32 %v256, %v128
    %v289 = vmax.f32 %v257, %v129
    %v290 = vmax.f32 %v258, %v130
    %291 = vst [vmem:[#allocation3] sm:$0xff] %v259
    %292 = vst [vmem:[#allocation3 + $0x8] sm:$0xff] %v260
    %293 = vst [vmem:[#allocation3 + $0x10] sm:$0xff] %v261
    %294 = vst [vmem:[#allocation3 + $0x18] sm:$0xff] %v262
    %295 = vst [vmem:[#allocation3 + $0x20] sm:$0xff] %v263
    %296 = vst [vmem:[#allocation3 + $0x28] sm:$0xff] %v264
    %297 = vst [vmem:[#allocation3 + $0x30] sm:$0xff] %v265
    %298 = vst [vmem:[#allocation3 + $0x38] sm:$0xff] %v266
    %299 = vst [vmem:[#allocation3 + $0x40] sm:$0xff] %v267
    %300 = vst [vmem:[#allocation3 + $0x48] sm:$0xff] %v268
    %301 = vst [vmem:[#allocation3 + $0x50] sm:$0xff] %v269
    %302 = vst [vmem:[#allocation3 + $0x58] sm:$0xff] %v270
    %303 = vst [vmem:[#allocation3 + $0x60] sm:$0xff] %v271
    %304 = vst [vmem:[#allocation3 + $0x68] sm:$0xff] %v272
    %305 = vst [vmem:[#allocation3 + $0x70] sm:$0xff] %v273
    %306 = vst [vmem:[#allocation3 + $0x78] sm:$0xff] %v274
    %307 = vst [vmem:[#allocation3 + $0x80] sm:$0xff] %v275
    %308 = vst [vmem:[#allocation3 + $0x88] sm:$0xff] %v276
    %309 = vst [vmem:[#allocation3 + $0x90] sm:$0xff] %v277
    %310 = vst [vmem:[#allocation3 + $0x98] sm:$0xff] %v278
    %311 = vst [vmem:[#allocation3 + $0xa0] sm:$0xff] %v279
    %312 = vst [vmem:[#allocation3 + $0xa8] sm:$0xff] %v280
    %313 = vst [vmem:[#allocation3 + $0xb0] sm:$0xff] %v281
    %314 = vst [vmem:[#allocation3 + $0xb8] sm:$0xff] %v282
    %315 = vst [vmem:[#allocation3 + $0xc0] sm:$0xff] %v283
    %316 = vst [vmem:[#allocation3 + $0xc8] sm:$0xff] %v284
    %317 = vst [vmem:[#allocation3 + $0xd0] sm:$0xff] %v285
    %318 = vst [vmem:[#allocation3 + $0xd8] sm:$0xff] %v286
    %319 = vst [vmem:[#allocation3 + $0xe0] sm:$0xff] %v287
    %320 = vst [vmem:[#allocation3 + $0xe8] sm:$0xff] %v288
    %321 = vst [vmem:[#allocation3 + $0xf0] sm:$0xff] %v289
    %322 = vst [vmem:[#allocation3 + $0xf8] sm:$0xff] %v290
    // Predicated region
    $region22: #{tpu_custom_call.1} parent=1 // pred_check
      %p323 = pneg %p31
    $region23: #{tpu_custom_call.1} parent=1 // pred_check_branch
      %325 = sbr.rel (%p323) target = $region25
    $region24: #{tpu_custom_call.1} parent=1 // pred_region
      %v326 = vld [vmem:[#allocation2] sm:$0xff]
      %v327 = vld [vmem:[#allocation2 + $0x8] sm:$0xff]
      %v328 = vld [vmem:[#allocation2 + $0x10] sm:$0xff]
      %v329 = vld [vmem:[#allocation2 + $0x18] sm:$0xff]
      %v330 = vld [vmem:[#allocation2 + $0x20] sm:$0xff]
      %v331 = vld [vmem:[#allocation2 + $0x28] sm:$0xff]
      %v332 = vld [vmem:[#allocation2 + $0x30] sm:$0xff]
      %v333 = vld [vmem:[#allocation2 + $0x38] sm:$0xff]
      %v334 = vld [vmem:[#allocation2 + $0x40] sm:$0xff]
      %v335 = vld [vmem:[#allocation2 + $0x48] sm:$0xff]
      %v336 = vld [vmem:[#allocation2 + $0x50] sm:$0xff]
      %v337 = vld [vmem:[#allocation2 + $0x58] sm:$0xff]
      %v338 = vld [vmem:[#allocation2 + $0x60] sm:$0xff]
      %v339 = vld [vmem:[#allocation2 + $0x68] sm:$0xff]
      %v340 = vld [vmem:[#allocation2 + $0x70] sm:$0xff]
      %v341 = vld [vmem:[#allocation2 + $0x78] sm:$0xff]
      %v342 = vld [vmem:[#allocation2 + $0x80] sm:$0xff]
      %v343 = vld [vmem:[#allocation2 + $0x88] sm:$0xff]
      %v344 = vld [vmem:[#allocation2 + $0x90] sm:$0xff]
      %v345 = vld [vmem:[#allocation2 + $0x98] sm:$0xff]
      %v346 = vld [vmem:[#allocation2 + $0xa0] sm:$0xff]
      %v347 = vld [vmem:[#allocation2 + $0xa8] sm:$0xff]
      %v348 = vld [vmem:[#allocation2 + $0xb0] sm:$0xff]
      %v349 = vld [vmem:[#allocation2 + $0xb8] sm:$0xff]
      %v350 = vld [vmem:[#allocation2 + $0xc0] sm:$0xff]
      %v351 = vld [vmem:[#allocation2 + $0xc8] sm:$0xff]
      %v352 = vld [vmem:[#allocation2 + $0xd0] sm:$0xff]
      %v353 = vld [vmem:[#allocation2 + $0xd8] sm:$0xff]
      %v354 = vld [vmem:[#allocation2 + $0xe0] sm:$0xff]
      %v355 = vld [vmem:[#allocation2 + $0xe8] sm:$0xff]
      %v356 = vld [vmem:[#allocation2 + $0xf0] sm:$0xff]
      %v357 = vld [vmem:[#allocation2 + $0xf8] sm:$0xff]
      %v358 = vadd.f32 %v326, %v327
      %359 = vadd.xlane.f32.xlu0 %v358
      %v360 = vpop.xlane.xlu0 %359
      %v361 = vadd.f32 %v328, %v329
      %362 = vadd.xlane.f32.xlu0 %v361
      %v363 = vpop.xlane.xlu0 %362
      %v364 = vadd.f32 %v330, %v331
      %365 = vadd.xlane.f32.xlu0 %v364
      %v366 = vpop.xlane.xlu0 %365
      %v367 = vadd.f32 %v332, %v333
      %368 = vadd.xlane.f32.xlu0 %v367
      %v369 = vpop.xlane.xlu0 %368
      %v370 = vadd.f32 %v334, %v335
      %371 = vadd.xlane.f32.xlu0 %v370
      %v372 = vpop.xlane.xlu0 %371
      %v373 = vadd.f32 %v336, %v337
      %374 = vadd.xlane.f32.xlu0 %v373
      %v375 = vpop.xlane.xlu0 %374
      %v376 = vadd.f32 %v338, %v339
      %377 = vadd.xlane.f32.xlu0 %v376
      %v378 = vpop.xlane.xlu0 %377
      %v379 = vadd.f32 %v340, %v341
      %380 = vadd.xlane.f32.xlu0 %v379
      %v381 = vpop.xlane.xlu0 %380
      %v382 = vadd.f32 %v342, %v343
      %383 = vadd.xlane.f32.xlu0 %v382
      %v384 = vpop.xlane.xlu0 %383
      %v385 = vadd.f32 %v344, %v345
      %386 = vadd.xlane.f32.xlu0 %v385
      %v387 = vpop.xlane.xlu0 %386
      %v388 = vadd.f32 %v346, %v347
      %389 = vadd.xlane.f32.xlu0 %v388
      %v390 = vpop.xlane.xlu0 %389
      %v391 = vadd.f32 %v348, %v349
      %392 = vadd.xlane.f32.xlu0 %v391
      %v393 = vpop.xlane.xlu0 %392
      %v394 = vadd.f32 %v350, %v351
      %395 = vadd.xlane.f32.xlu0 %v394
      %v396 = vpop.xlane.xlu0 %395
      %v397 = vadd.f32 %v352, %v353
      %398 = vadd.xlane.f32.xlu0 %v397
      %v399 = vpop.xlane.xlu0 %398
      %v400 = vadd.f32 %v354, %v355
      %401 = vadd.xlane.f32.xlu0 %v400
      %v402 = vpop.xlane.xlu0 %401
      %v403 = vadd.f32 %v356, %v357
      %404 = vadd.xlane.f32.xlu0 %v403
      %v405 = vpop.xlane.xlu0 %404
      %v406 = vld [vmem:[#allocation3] sm:$0xff]
      %v407 = vld [vmem:[#allocation3 + $0x8] sm:$0xff]
      %v408 = vld [vmem:[#allocation3 + $0x10] sm:$0xff]
      %v409 = vld [vmem:[#allocation3 + $0x18] sm:$0xff]
      %v410 = vld [vmem:[#allocation3 + $0x20] sm:$0xff]
      %v411 = vld [vmem:[#allocation3 + $0x28] sm:$0xff]
      %v412 = vld [vmem:[#allocation3 + $0x30] sm:$0xff]
      %v413 = vld [vmem:[#allocation3 + $0x38] sm:$0xff]
      %v414 = vld [vmem:[#allocation3 + $0x40] sm:$0xff]
      %v415 = vld [vmem:[#allocation3 + $0x48] sm:$0xff]
      %v416 = vld [vmem:[#allocation3 + $0x50] sm:$0xff]
      %v417 = vld [vmem:[#allocation3 + $0x58] sm:$0xff]
      %v418 = vld [vmem:[#allocation3 + $0x60] sm:$0xff]
      %v419 = vld [vmem:[#allocation3 + $0x68] sm:$0xff]
      %v420 = vld [vmem:[#allocation3 + $0x70] sm:$0xff]
      %v421 = vld [vmem:[#allocation3 + $0x78] sm:$0xff]
      %v422 = vld [vmem:[#allocation3 + $0x80] sm:$0xff]
      %v423 = vld [vmem:[#allocation3 + $0x88] sm:$0xff]
      %v424 = vld [vmem:[#allocation3 + $0x90] sm:$0xff]
      %v425 = vld [vmem:[#allocation3 + $0x98] sm:$0xff]
      %v426 = vld [vmem:[#allocation3 + $0xa0] sm:$0xff]
      %v427 = vld [vmem:[#allocation3 + $0xa8] sm:$0xff]
      %v428 = vld [vmem:[#allocation3 + $0xb0] sm:$0xff]
      %v429 = vld [vmem:[#allocation3 + $0xb8] sm:$0xff]
      %v430 = vld [vmem:[#allocation3 + $0xc0] sm:$0xff]
      %v431 = vld [vmem:[#allocation3 + $0xc8] sm:$0xff]
      %v432 = vld [vmem:[#allocation3 + $0xd0] sm:$0xff]
      %v433 = vld [vmem:[#allocation3 + $0xd8] sm:$0xff]
      %v434 = vld [vmem:[#allocation3 + $0xe0] sm:$0xff]
      %v435 = vld [vmem:[#allocation3 + $0xe8] sm:$0xff]
      %v436 = vld [vmem:[#allocation3 + $0xf0] sm:$0xff]
      %v437 = vld [vmem:[#allocation3 + $0xf8] sm:$0xff]
      %v438 = vmax.f32 %v406, %v407
      %439 = vmax.xlane.f32.xlu0 %v438
      %v440 = vpop.xlane.xlu0 %439
      %v441 = vmax.f32 %v408, %v409
      %442 = vmax.xlane.f32.xlu0 %v441
      %v443 = vpop.xlane.xlu0 %442
      %v444 = vmax.f32 %v410, %v411
      %445 = vmax.xlane.f32.xlu0 %v444
      %v446 = vpop.xlane.xlu0 %445
      %v447 = vmax.f32 %v412, %v413
      %448 = vmax.xlane.f32.xlu0 %v447
      %v449 = vpop.xlane.xlu0 %448
      %v450 = vmax.f32 %v414, %v415
      %451 = vmax.xlane.f32.xlu0 %v450
      %v452 = vpop.xlane.xlu0 %451
      %v453 = vmax.f32 %v416, %v417
      %454 = vmax.xlane.f32.xlu0 %v453
      %v455 = vpop.xlane.xlu0 %454
      %v456 = vmax.f32 %v418, %v419
      %457 = vmax.xlane.f32.xlu0 %v456
      %v458 = vpop.xlane.xlu0 %457
      %v459 = vmax.f32 %v420, %v421
      %460 = vmax.xlane.f32.xlu0 %v459
      %v461 = vpop.xlane.xlu0 %460
      %v462 = vmax.f32 %v422, %v423
      %463 = vmax.xlane.f32.xlu0 %v462
      %v464 = vpop.xlane.xlu0 %463
      %v465 = vmax.f32 %v424, %v425
      %466 = vmax.xlane.f32.xlu0 %v465
      %v467 = vpop.xlane.xlu0 %466
      %v468 = vmax.f32 %v426, %v427
      %469 = vmax.xlane.f32.xlu0 %v468
      %v470 = vpop.xlane.xlu0 %469
      %v471 = vmax.f32 %v428, %v429
      %472 = vmax.xlane.f32.xlu0 %v471
      %v473 = vpop.xlane.xlu0 %472
      %v474 = vmax.f32 %v430, %v431
      %475 = vmax.xlane.f32.xlu0 %v474
      %v476 = vpop.xlane.xlu0 %475
      %v477 = vmax.f32 %v432, %v433
      %478 = vmax.xlane.f32.xlu0 %v477
      %v479 = vpop.xlane.xlu0 %478
      %v480 = vmax.f32 %v434, %v435
      %481 = vmax.xlane.f32.xlu0 %v480
      %v482 = vpop.xlane.xlu0 %481
      %v483 = vmax.f32 %v436, %v437
      %484 = vmax.xlane.f32.xlu0 %v483
      %v485 = vpop.xlane.xlu0 %484
      %v486 = vmul.f32 %v360, 0.00390625
      %v487 = vmul.f32 %v363, 0.00390625
      %v488 = vmul.f32 %v366, 0.00390625
      %v489 = vmul.f32 %v369, 0.00390625
      %v490 = vmul.f32 %v372, 0.00390625
      %v491 = vmul.f32 %v375, 0.00390625
      %v492 = vmul.f32 %v378, 0.00390625
      %v493 = vmul.f32 %v381, 0.00390625
      %v494 = vmul.f32 %v384, 0.00390625
      %v495 = vmul.f32 %v387, 0.00390625
      %v496 = vmul.f32 %v390, 0.00390625
      %v497 = vmul.f32 %v393, 0.00390625
      %v498 = vmul.f32 %v396, 0.00390625
      %v499 = vmul.f32 %v399, 0.00390625
      %v500 = vmul.f32 %v402, 0.00390625
      %v501 = vmul.f32 %v405, 0.00390625
      %v502 = vld [vmem:[%s1] sm:$0xff]
      %v503 = vld [vmem:[%s1 + $0x8] sm:$0xff]
      %v504 = vld [vmem:[%s1 + $0x10] sm:$0xff]
      %v505 = vld [vmem:[%s1 + $0x18] sm:$0xff]
      %v506 = vld [vmem:[%s1 + $0x20] sm:$0xff]
      %v507 = vld [vmem:[%s1 + $0x28] sm:$0xff]
      %v508 = vld [vmem:[%s1 + $0x30] sm:$0xff]
      %v509 = vld [vmem:[%s1 + $0x38] sm:$0xff]
      %v510 = vmul.f32 %v486, %v502
      %v511 = vmul.f32 %v487, %v503
      %v512 = vmul.f32 %v488, %v504
      %v513 = vmul.f32 %v489, %v505
      %v514 = vmul.f32 %v490, %v506
      %v515 = vmul.f32 %v491, %v507
      %v516 = vmul.f32 %v492, %v508
      %v517 = vmul.f32 %v493, %v509
      %v518 = vmul.f32 %v494, %v502
      %v519 = vmul.f32 %v495, %v503
      %v520 = vmul.f32 %v496, %v504
      %v521 = vmul.f32 %v497, %v505
      %v522 = vmul.f32 %v498, %v506
      %v523 = vmul.f32 %v499, %v507
      %v524 = vmul.f32 %v500, %v508
      %v525 = vmul.f32 %v501, %v509
      %vm526 = vcmask 130048
      %v527 = vsel %vm526, %v510, 0.0
      %v528 = vsel %vm526, %v511, 0.0
      %v529 = vadd.f32 %v527, %v528
      %v530 = vsel %vm526, %v512, 0.0
      %v531 = vadd.f32 %v529, %v530
      %v532 = vsel %vm526, %v513, 0.0
      %v533 = vadd.f32 %v531, %v532
      %v534 = vsel %vm526, %v514, 0.0
      %v535 = vadd.f32 %v533, %v534
      %v536 = vsel %vm526, %v515, 0.0
      %v537 = vadd.f32 %v535, %v536
      %v538 = vsel %vm526, %v516, 0.0
      %v539 = vadd.f32 %v537, %v538
      %v540 = vsel %vm526, %v517, 0.0
      %v541 = vadd.f32 %v539, %v540
      %v542 = vrot.slane %v541, 4
      %v543 = vadd.f32 %v541, %v542
      %v544 = vrot.slane %v543, 2
      %v545 = vadd.f32 %v543, %v544
      %v546 = vrot.slane %v545, 1
      %v547 = vadd.f32 %v545, %v546
      %v548 = vsel %vm526, %v518, 0.0
      %v549 = vsel %vm526, %v519, 0.0
      %v550 = vadd.f32 %v548, %v549
      %v551 = vsel %vm526, %v520, 0.0
      %v552 = vadd.f32 %v550, %v551
      %v553 = vsel %vm526, %v521, 0.0
      %v554 = vadd.f32 %v552, %v553
      %v555 = vsel %vm526, %v522, 0.0
      %v556 = vadd.f32 %v554, %v555
      %v557 = vsel %vm526, %v523, 0.0
      %v558 = vadd.f32 %v556, %v557
      %v559 = vsel %vm526, %v524, 0.0
      %v560 = vadd.f32 %v558, %v559
      %v561 = vsel %vm526, %v525, 0.0
      %v562 = vadd.f32 %v560, %v561
      %v563 = vrot.slane %v562, 4
      %v564 = vadd.f32 %v562, %v563
      %v565 = vrot.slane %v564, 2
      %v566 = vadd.f32 %v564, %v565
      %v567 = vrot.slane %v566, 1
      %v568 = vadd.f32 %v566, %v567
      %v569 = vmax.f32 %v547, 0.0
      %v570 = vmax.f32 %v568, 0.0
      %v571 = vmul.f32 %v440, %v502
      %v572 = vmul.f32 %v443, %v503
      %v573 = vmul.f32 %v446, %v504
      %v574 = vmul.f32 %v449, %v505
      %v575 = vmul.f32 %v452, %v506
      %v576 = vmul.f32 %v455, %v507
      %v577 = vmul.f32 %v458, %v508
      %v578 = vmul.f32 %v461, %v509
      %v579 = vmul.f32 %v464, %v502
      %v580 = vmul.f32 %v467, %v503
      %v581 = vmul.f32 %v470, %v504
      %v582 = vmul.f32 %v473, %v505
      %v583 = vmul.f32 %v476, %v506
      %v584 = vmul.f32 %v479, %v507
      %v585 = vmul.f32 %v482, %v508
      %v586 = vmul.f32 %v485, %v509
      %v587 = vsel %vm526, %v571, 0.0
      %v588 = vsel %vm526, %v572, 0.0
      %v589 = vadd.f32 %v587, %v588
      %v590 = vsel %vm526, %v573, 0.0
      %v591 = vadd.f32 %v589, %v590
      %v592 = vsel %vm526, %v574, 0.0
      %v593 = vadd.f32 %v591, %v592
      %v594 = vsel %vm526, %v575, 0.0
      %v595 = vadd.f32 %v593, %v594
      %v596 = vsel %vm526, %v576, 0.0
      %v597 = vadd.f32 %v595, %v596
      %v598 = vsel %vm526, %v577, 0.0
      %v599 = vadd.f32 %v597, %v598
      %v600 = vsel %vm526, %v578, 0.0
      %v601 = vadd.f32 %v599, %v600
      %v602 = vrot.slane %v601, 4
      %v603 = vadd.f32 %v601, %v602
      %v604 = vrot.slane %v603, 2
      %v605 = vadd.f32 %v603, %v604
      %v606 = vrot.slane %v605, 1
      %v607 = vadd.f32 %v605, %v606
      %v608 = vsel %vm526, %v579, 0.0
      %v609 = vsel %vm526, %v580, 0.0
      %v610 = vadd.f32 %v608, %v609
      %v611 = vsel %vm526, %v581, 0.0
      %v612 = vadd.f32 %v610, %v611
      %v613 = vsel %vm526, %v582, 0.0
      %v614 = vadd.f32 %v612, %v613
      %v615 = vsel %vm526, %v583, 0.0
      %v616 = vadd.f32 %v614, %v615
      %v617 = vsel %vm526, %v584, 0.0
      %v618 = vadd.f32 %v616, %v617
      %v619 = vsel %vm526, %v585, 0.0
      %v620 = vadd.f32 %v618, %v619
      %v621 = vsel %vm526, %v586, 0.0
      %v622 = vadd.f32 %v620, %v621
      %v623 = vrot.slane %v622, 4
      %v624 = vadd.f32 %v622, %v623
      %v625 = vrot.slane %v624, 2
      %v626 = vadd.f32 %v624, %v625
      %v627 = vrot.slane %v626, 1
      %v628 = vadd.f32 %v626, %v627
      %v629 = vmax.f32 %v607, 0.0
      %v630 = vmax.f32 %v628, 0.0
      %v631 = vadd.f32 %v569, %v629
      %v632 = vadd.f32 %v570, %v630
      %v633 = vld [vmem:[%s2] sm:$0xff]
      %v634 = vld [vmem:[%s2 + $0x8] sm:$0xff]
      %v635 = vld [vmem:[%s2 + $0x10] sm:$0xff]
      %v636 = vld [vmem:[%s2 + $0x18] sm:$0xff]
      %v637 = vld [vmem:[%s2 + $0x20] sm:$0xff]
      %v638 = vld [vmem:[%s2 + $0x28] sm:$0xff]
      %v639 = vld [vmem:[%s2 + $0x30] sm:$0xff]
      %v640 = vld [vmem:[%s2 + $0x38] sm:$0xff]
      %v641 = vmul.f32 %v631, %v633
      %v642 = vmul.f32 %v631, %v634
      %v643 = vmul.f32 %v631, %v635
      %v644 = vmul.f32 %v631, %v636
      %v645 = vmul.f32 %v631, %v637
      %v646 = vmul.f32 %v631, %v638
      %v647 = vmul.f32 %v631, %v639
      %v648 = vmul.f32 %v631, %v640
      %v649 = vmul.f32 %v632, %v633
      %v650 = vmul.f32 %v632, %v634
      %v651 = vmul.f32 %v632, %v635
      %v652 = vmul.f32 %v632, %v636
      %v653 = vmul.f32 %v632, %v637
      %v654 = vmul.f32 %v632, %v638
      %v655 = vmul.f32 %v632, %v639
      %v656 = vmul.f32 %v632, %v640
      %v657 = vsel %vm526, %v641, 0.0
      %658 = vadd.xlane.f32.xlu0 %v657
      %v659 = vpop.xlane.xlu0 %658
      %v660 = vsel %vm526, %v642, 0.0
      %661 = vadd.xlane.f32.xlu0 %v660
      %v662 = vpop.xlane.xlu0 %661
      %v663 = vsel %vm526, %v643, 0.0
      %664 = vadd.xlane.f32.xlu0 %v663
      %v665 = vpop.xlane.xlu0 %664
      %v666 = vsel %vm526, %v644, 0.0
      %667 = vadd.xlane.f32.xlu0 %v666
      %v668 = vpop.xlane.xlu0 %667
      %v669 = vsel %vm526, %v645, 0.0
      %670 = vadd.xlane.f32.xlu0 %v669
      %v671 = vpop.xlane.xlu0 %670
      %v672 = vsel %vm526, %v646, 0.0
      %673 = vadd.xlane.f32.xlu0 %v672
      %v674 = vpop.xlane.xlu0 %673
      %v675 = vsel %vm526, %v647, 0.0
      %676 = vadd.xlane.f32.xlu0 %v675
      %v677 = vpop.xlane.xlu0 %676
      %v678 = vsel %vm526, %v648, 0.0
      %679 = vadd.xlane.f32.xlu0 %v678
      %v680 = vpop.xlane.xlu0 %679
      %v681 = vsel %vm526, %v649, 0.0
      %682 = vadd.xlane.f32.xlu0 %v681
      %v683 = vpop.xlane.xlu0 %682
      %v684 = vsel %vm526, %v650, 0.0
      %685 = vadd.xlane.f32.xlu0 %v684
      %v686 = vpop.xlane.xlu0 %685
      %v687 = vsel %vm526, %v651, 0.0
      %688 = vadd.xlane.f32.xlu0 %v687
      %v689 = vpop.xlane.xlu0 %688
      %v690 = vsel %vm526, %v652, 0.0
      %691 = vadd.xlane.f32.xlu0 %v690
      %v692 = vpop.xlane.xlu0 %691
      %v693 = vsel %vm526, %v653, 0.0
      %694 = vadd.xlane.f32.xlu0 %v693
      %v695 = vpop.xlane.xlu0 %694
      %v696 = vsel %vm526, %v654, 0.0
      %697 = vadd.xlane.f32.xlu0 %v696
      %v698 = vpop.xlane.xlu0 %697
      %v699 = vsel %vm526, %v655, 0.0
      %700 = vadd.xlane.f32.xlu0 %v699
      %v701 = vpop.xlane.xlu0 %700
      %v702 = vsel %vm526, %v656, 0.0
      %703 = vadd.xlane.f32.xlu0 %v702
      %v704 = vpop.xlane.xlu0 %703
      %v705 = vsub.f32 0.0, %v659
      %v706 = vsub.f32 0.0, %v662
      %v707 = vsub.f32 0.0, %v665
      %v708 = vsub.f32 0.0, %v668
      %v709 = vsub.f32 0.0, %v671
      %v710 = vsub.f32 0.0, %v674
      %v711 = vsub.f32 0.0, %v677
      %v712 = vsub.f32 0.0, %v680
      %v713 = vsub.f32 0.0, %v683
      %v714 = vsub.f32 0.0, %v686
      %v715 = vsub.f32 0.0, %v689
      %v716 = vsub.f32 0.0, %v692
      %v717 = vsub.f32 0.0, %v695
      %v718 = vsub.f32 0.0, %v698
      %v719 = vsub.f32 0.0, %v701
      %v720 = vsub.f32 0.0, %v704
      %v721 = vmul.f32 %v705, 1.442695
      %v722 = vpow.pop %v721
      %v723 = vmul.f32 %v706, 1.442695
      %v724 = vpow.pop %v723
      %v725 = vmul.f32 %v707, 1.442695
      %v726 = vpow.pop %v725
      %v727 = vmul.f32 %v708, 1.442695
      %v728 = vpow.pop %v727
      %v729 = vmul.f32 %v709, 1.442695
      %v730 = vpow.pop %v729
      %v731 = vmul.f32 %v710, 1.442695
      %v732 = vpow.pop %v731
      %v733 = vmul.f32 %v711, 1.442695
      %v734 = vpow.pop %v733
      %v735 = vmul.f32 %v712, 1.442695
      %v736 = vpow.pop %v735
      %v737 = vmul.f32 %v713, 1.442695
      %v738 = vpow.pop %v737
      %v739 = vmul.f32 %v714, 1.442695
      %v740 = vpow.pop %v739
      %v741 = vmul.f32 %v715, 1.442695
      %v742 = vpow.pop %v741
      %v743 = vmul.f32 %v716, 1.442695
      %v744 = vpow.pop %v743
      %v745 = vmul.f32 %v717, 1.442695
      %v746 = vpow.pop %v745
      %v747 = vmul.f32 %v718, 1.442695
      %v748 = vpow.pop %v747
      %v749 = vmul.f32 %v719, 1.442695
      %v750 = vpow.pop %v749
      %v751 = vmul.f32 %v720, 1.442695
      %v752 = vpow.pop %v751
      %v753 = vadd.f32 %v722, 1.0
      %v754 = vadd.f32 %v724, 1.0
      %v755 = vadd.f32 %v726, 1.0
      %v756 = vadd.f32 %v728, 1.0
      %v757 = vadd.f32 %v730, 1.0
      %v758 = vadd.f32 %v732, 1.0
      %v759 = vadd.f32 %v734, 1.0
      %v760 = vadd.f32 %v736, 1.0
      %v761 = vadd.f32 %v738, 1.0
      %v762 = vadd.f32 %v740, 1.0
      %v763 = vadd.f32 %v742, 1.0
      %v764 = vadd.f32 %v744, 1.0
      %v765 = vadd.f32 %v746, 1.0
      %v766 = vadd.f32 %v748, 1.0
      %v767 = vadd.f32 %v750, 1.0
      %v768 = vadd.f32 %v752, 1.0
      %v769 = vrcp.pop %v753
      %v770 = vmul.f32 %v753, %v769
      %v771 = vsub.f32 1.0, %v770
      %v772 = vmul.f32 %v769, %v771
      %v773 = vadd.f32 %v769, %v772
      %vm774 = vweird.f32 %v753
      %vm775 = vweird.f32 %v769
      %vm776 = vmor %vm774, %vm775
      %v777 = vsel %vm776, %v769, %v773
      %v778 = vand.u32 2147483647, %v753
      %vm779 = vcmp.eq.f32.partialorder %v778, 8.507059e+37
      %v780 = vand.u32 %v753, 2147483648
      %v781 = vor.u32 1.1754944e-38, %v780
      %v782 = vsel %vm779, %v781, %v777
      %v783 = vmul.f32 1.0, %v782
      %v784 = vrcp.pop %v754
      %v785 = vmul.f32 %v754, %v784
      %v786 = vsub.f32 1.0, %v785
      %v787 = vmul.f32 %v784, %v786
      %v788 = vadd.f32 %v784, %v787
      %vm789 = vweird.f32 %v754
      %vm790 = vweird.f32 %v784
      %vm791 = vmor %vm789, %vm790
      %v792 = vsel %vm791, %v784, %v788
      %v793 = vand.u32 2147483647, %v754
      %vm794 = vcmp.eq.f32.partialorder %v793, 8.507059e+37
      %v795 = vand.u32 %v754, 2147483648
      %v796 = vor.u32 1.1754944e-38, %v795
      %v797 = vsel %vm794, %v796, %v792
      %v798 = vmul.f32 1.0, %v797
      %v799 = vrcp.pop %v755
      %v800 = vmul.f32 %v755, %v799
      %v801 = vsub.f32 1.0, %v800
      %v802 = vmul.f32 %v799, %v801
      %v803 = vadd.f32 %v799, %v802
      %vm804 = vweird.f32 %v755
      %vm805 = vweird.f32 %v799
      %vm806 = vmor %vm804, %vm805
      %v807 = vsel %vm806, %v799, %v803
      %v808 = vand.u32 2147483647, %v755
      %vm809 = vcmp.eq.f32.partialorder %v808, 8.507059e+37
      %v810 = vand.u32 %v755, 2147483648
      %v811 = vor.u32 1.1754944e-38, %v810
      %v812 = vsel %vm809, %v811, %v807
      %v813 = vmul.f32 1.0, %v812
      %v814 = vrcp.pop %v756
      %v815 = vmul.f32 %v756, %v814
      %v816 = vsub.f32 1.0, %v815
      %v817 = vmul.f32 %v814, %v816
      %v818 = vadd.f32 %v814, %v817
      %vm819 = vweird.f32 %v756
      %vm820 = vweird.f32 %v814
      %vm821 = vmor %vm819, %vm820
      %v822 = vsel %vm821, %v814, %v818
      %v823 = vand.u32 2147483647, %v756
      %vm824 = vcmp.eq.f32.partialorder %v823, 8.507059e+37
      %v825 = vand.u32 %v756, 2147483648
      %v826 = vor.u32 1.1754944e-38, %v825
      %v827 = vsel %vm824, %v826, %v822
      %v828 = vmul.f32 1.0, %v827
      %v829 = vrcp.pop %v757
      %v830 = vmul.f32 %v757, %v829
      %v831 = vsub.f32 1.0, %v830
      %v832 = vmul.f32 %v829, %v831
      %v833 = vadd.f32 %v829, %v832
      %vm834 = vweird.f32 %v757
      %vm835 = vweird.f32 %v829
      %vm836 = vmor %vm834, %vm835
      %v837 = vsel %vm836, %v829, %v833
      %v838 = vand.u32 2147483647, %v757
      %vm839 = vcmp.eq.f32.partialorder %v838, 8.507059e+37
      %v840 = vand.u32 %v757, 2147483648
      %v841 = vor.u32 1.1754944e-38, %v840
      %v842 = vsel %vm839, %v841, %v837
      %v843 = vmul.f32 1.0, %v842
      %v844 = vrcp.pop %v758
      %v845 = vmul.f32 %v758, %v844
      %v846 = vsub.f32 1.0, %v845
      %v847 = vmul.f32 %v844, %v846
      %v848 = vadd.f32 %v844, %v847
      %vm849 = vweird.f32 %v758
      %vm850 = vweird.f32 %v844
      %vm851 = vmor %vm849, %vm850
      %v852 = vsel %vm851, %v844, %v848
      %v853 = vand.u32 2147483647, %v758
      %vm854 = vcmp.eq.f32.partialorder %v853, 8.507059e+37
      %v855 = vand.u32 %v758, 2147483648
      %v856 = vor.u32 1.1754944e-38, %v855
      %v857 = vsel %vm854, %v856, %v852
      %v858 = vmul.f32 1.0, %v857
      %v859 = vrcp.pop %v759
      %v860 = vmul.f32 %v759, %v859
      %v861 = vsub.f32 1.0, %v860
      %v862 = vmul.f32 %v859, %v861
      %v863 = vadd.f32 %v859, %v862
      %vm864 = vweird.f32 %v759
      %vm865 = vweird.f32 %v859
      %vm866 = vmor %vm864, %vm865
      %v867 = vsel %vm866, %v859, %v863
      %v868 = vand.u32 2147483647, %v759
      %vm869 = vcmp.eq.f32.partialorder %v868, 8.507059e+37
      %v870 = vand.u32 %v759, 2147483648
      %v871 = vor.u32 1.1754944e-38, %v870
      %v872 = vsel %vm869, %v871, %v867
      %v873 = vmul.f32 1.0, %v872
      %v874 = vrcp.pop %v760
      %v875 = vmul.f32 %v760, %v874
      %v876 = vsub.f32 1.0, %v875
      %v877 = vmul.f32 %v874, %v876
      %v878 = vadd.f32 %v874, %v877
      %vm879 = vweird.f32 %v760
      %vm880 = vweird.f32 %v874
      %vm881 = vmor %vm879, %vm880
      %v882 = vsel %vm881, %v874, %v878
      %v883 = vand.u32 2147483647, %v760
      %vm884 = vcmp.eq.f32.partialorder %v883, 8.507059e+37
      %v885 = vand.u32 %v760, 2147483648
      %v886 = vor.u32 1.1754944e-38, %v885
      %v887 = vsel %vm884, %v886, %v882
      %v888 = vmul.f32 1.0, %v887
      %v889 = vrcp.pop %v761
      %v890 = vmul.f32 %v761, %v889
      %v891 = vsub.f32 1.0, %v890
      %v892 = vmul.f32 %v889, %v891
      %v893 = vadd.f32 %v889, %v892
      %vm894 = vweird.f32 %v761
      %vm895 = vweird.f32 %v889
      %vm896 = vmor %vm894, %vm895
      %v897 = vsel %vm896, %v889, %v893
      %v898 = vand.u32 2147483647, %v761
      %vm899 = vcmp.eq.f32.partialorder %v898, 8.507059e+37
      %v900 = vand.u32 %v761, 2147483648
      %v901 = vor.u32 1.1754944e-38, %v900
      %v902 = vsel %vm899, %v901, %v897
      %v903 = vmul.f32 1.0, %v902
      %v904 = vrcp.pop %v762
      %v905 = vmul.f32 %v762, %v904
      %v906 = vsub.f32 1.0, %v905
      %v907 = vmul.f32 %v904, %v906
      %v908 = vadd.f32 %v904, %v907
      %vm909 = vweird.f32 %v762
      %vm910 = vweird.f32 %v904
      %vm911 = vmor %vm909, %vm910
      %v912 = vsel %vm911, %v904, %v908
      %v913 = vand.u32 2147483647, %v762
      %vm914 = vcmp.eq.f32.partialorder %v913, 8.507059e+37
      %v915 = vand.u32 %v762, 2147483648
      %v916 = vor.u32 1.1754944e-38, %v915
      %v917 = vsel %vm914, %v916, %v912
      %v918 = vmul.f32 1.0, %v917
      %v919 = vrcp.pop %v763
      %v920 = vmul.f32 %v763, %v919
      %v921 = vsub.f32 1.0, %v920
      %v922 = vmul.f32 %v919, %v921
      %v923 = vadd.f32 %v919, %v922
      %vm924 = vweird.f32 %v763
      %vm925 = vweird.f32 %v919
      %vm926 = vmor %vm924, %vm925
      %v927 = vsel %vm926, %v919, %v923
      %v928 = vand.u32 2147483647, %v763
      %vm929 = vcmp.eq.f32.partialorder %v928, 8.507059e+37
      %v930 = vand.u32 %v763, 2147483648
      %v931 = vor.u32 1.1754944e-38, %v930
      %v932 = vsel %vm929, %v931, %v927
      %v933 = vmul.f32 1.0, %v932
      %v934 = vrcp.pop %v764
      %v935 = vmul.f32 %v764, %v934
      %v936 = vsub.f32 1.0, %v935
      %v937 = vmul.f32 %v934, %v936
      %v938 = vadd.f32 %v934, %v937
      %vm939 = vweird.f32 %v764
      %vm940 = vweird.f32 %v934
      %vm941 = vmor %vm939, %vm940
      %v942 = vsel %vm941, %v934, %v938
      %v943 = vand.u32 2147483647, %v764
      %vm944 = vcmp.eq.f32.partialorder %v943, 8.507059e+37
      %v945 = vand.u32 %v764, 2147483648
      %v946 = vor.u32 1.1754944e-38, %v945
      %v947 = vsel %vm944, %v946, %v942
      %v948 = vmul.f32 1.0, %v947
      %v949 = vrcp.pop %v765
      %v950 = vmul.f32 %v765, %v949
      %v951 = vsub.f32 1.0, %v950
      %v952 = vmul.f32 %v949, %v951
      %v953 = vadd.f32 %v949, %v952
      %vm954 = vweird.f32 %v765
      %vm955 = vweird.f32 %v949
      %vm956 = vmor %vm954, %vm955
      %v957 = vsel %vm956, %v949, %v953
      %v958 = vand.u32 2147483647, %v765
      %vm959 = vcmp.eq.f32.partialorder %v958, 8.507059e+37
      %v960 = vand.u32 %v765, 2147483648
      %v961 = vor.u32 1.1754944e-38, %v960
      %v962 = vsel %vm959, %v961, %v957
      %v963 = vmul.f32 1.0, %v962
      %v964 = vrcp.pop %v766
      %v965 = vmul.f32 %v766, %v964
      %v966 = vsub.f32 1.0, %v965
      %v967 = vmul.f32 %v964, %v966
      %v968 = vadd.f32 %v964, %v967
      %vm969 = vweird.f32 %v766
      %vm970 = vweird.f32 %v964
      %vm971 = vmor %vm969, %vm970
      %v972 = vsel %vm971, %v964, %v968
      %v973 = vand.u32 2147483647, %v766
      %vm974 = vcmp.eq.f32.partialorder %v973, 8.507059e+37
      %v975 = vand.u32 %v766, 2147483648
      %v976 = vor.u32 1.1754944e-38, %v975
      %v977 = vsel %vm974, %v976, %v972
      %v978 = vmul.f32 1.0, %v977
      %v979 = vrcp.pop %v767
      %v980 = vmul.f32 %v767, %v979
      %v981 = vsub.f32 1.0, %v980
      %v982 = vmul.f32 %v979, %v981
      %v983 = vadd.f32 %v979, %v982
      %vm984 = vweird.f32 %v767
      %vm985 = vweird.f32 %v979
      %vm986 = vmor %vm984, %vm985
      %v987 = vsel %vm986, %v979, %v983
      %v988 = vand.u32 2147483647, %v767
      %vm989 = vcmp.eq.f32.partialorder %v988, 8.507059e+37
      %v990 = vand.u32 %v767, 2147483648
      %v991 = vor.u32 1.1754944e-38, %v990
      %v992 = vsel %vm989, %v991, %v987
      %v993 = vmul.f32 1.0, %v992
      %v994 = vrcp.pop %v768
      %v995 = vmul.f32 %v768, %v994
      %v996 = vsub.f32 1.0, %v995
      %v997 = vmul.f32 %v994, %v996
      %v998 = vadd.f32 %v994, %v997
      %vm999 = vweird.f32 %v768
      %vm1000 = vweird.f32 %v994
      %vm1001 = vmor %vm999, %vm1000
      %v1002 = vsel %vm1001, %v994, %v998
      %v1003 = vand.u32 2147483647, %v768
      %vm1004 = vcmp.eq.f32.partialorder %v1003, 8.507059e+37
      %v1005 = vand.u32 %v768, 2147483648
      %v1006 = vor.u32 1.1754944e-38, %v1005
      %v1007 = vsel %vm1004, %v1006, %v1002
      %v1008 = vmul.f32 1.0, %v1007
      %v1025 = vlaneseq
      %v1026 = vand.u32 %v1025, 127
      %v1027 = vperm.slane %v783, %v1026
      %v1028 = vadd.s32 %v1026, 4294967288
      %v1029 = vperm.slane %v798, %v1028
      %vm1030 = vcmask 130112
      %v1031 = vsel %vm1030, %v1029, %v1027
      %v1032 = vadd.s32 %v1026, 4294967280
      %v1033 = vperm.slane %v813, %v1032
      %vm1034 = vcmask 195712
      %v1035 = vsel %vm1034, %v1033, %v1031
      %v1036 = vadd.s32 %v1026, 4294967272
      %v1037 = vperm.slane %v828, %v1036
      %vm1038 = vcmask 261312
      %v1039 = vsel %vm1038, %v1037, %v1035
      %v1040 = vadd.s32 %v1026, 4294967264
      %v1041 = vperm.slane %v843, %v1040
      %vm1042 = vcmask 326912
      %v1043 = vsel %vm1042, %v1041, %v1039
      %v1044 = vadd.s32 %v1026, 4294967256
      %v1045 = vperm.slane %v858, %v1044
      %vm1046 = vcmask 392512
      %v1047 = vsel %vm1046, %v1045, %v1043
      %v1048 = vadd.s32 %v1026, 4294967248
      %v1049 = vperm.slane %v873, %v1048
      %vm1050 = vcmask 458112
      %v1051 = vsel %vm1050, %v1049, %v1047
      %v1052 = vadd.s32 %v1026, 4294967240
      %v1053 = vperm.slane %v888, %v1052
      %vm1054 = vcmask 523712
      %v1055 = vsel %vm1054, %v1053, %v1051
      %v1056 = vperm.slane %v903, %v1026
      %v1057 = vperm.slane %v918, %v1028
      %v1058 = vsel %vm1030, %v1057, %v1056
      %v1059 = vperm.slane %v933, %v1032
      %v1060 = vsel %vm1034, %v1059, %v1058
      %v1061 = vperm.slane %v948, %v1036
      %v1062 = vsel %vm1038, %v1061, %v1060
      %v1063 = vperm.slane %v963, %v1040
      %v1064 = vsel %vm1042, %v1063, %v1062
      %v1065 = vperm.slane %v978, %v1044
      %v1066 = vsel %vm1046, %v1065, %v1064
      %v1067 = vperm.slane %v993, %v1048
      %v1068 = vsel %vm1050, %v1067, %v1066
      %v1069 = vperm.slane %v1008, %v1052
      %v1070 = vsel %vm1054, %v1069, %v1068
      %vm1071 = vcmask 1041409
      %v1072 = vsel %vm1071, %v1070, %v1055
      %vm1074 = vcmask 517120
      %1075 = vst.msk [vmem:[#allocation7] sm:$0x3] %vm1074, %v1072
    $region25: #{tpu_custom_call.1} parent=1 // pred_fallthru
      _
    // Predicated region
    $region26: #{tpu_custom_call.1} parent=1 // pred_check
      _
    $region27: #{tpu_custom_call.1} parent=1 // pred_check_branch
      %1077 = sbr.rel (0) target = $region29
    $region28: #{tpu_custom_call.1} parent=1 // pred_region
      %1079 = vsyncadd [#allocation6], 0
      %s1081 = sshll.u32 [#allocation7], 4
      %s1082 = int_to_ptr.vmem [resolvable:$true] %s1081
      %s1083 = sshll.u32 %s3, 4
      %s1084 = int_to_ptr.hbm [resolvable:$true] %s1083
      %1086 = dma.vmem_to_hbm [thread:$0]  %s1082, 32, %s1084, [#allocation6]
    $region29: #{tpu_custom_call.1} parent=1 // pred_fallthru
      _
    // Predicated region
    $region30: #{tpu_custom_call.1} parent=1 // pred_check
      _
    $region31: #{tpu_custom_call.1} parent=1 // pred_check_branch
      %1088 = sbr.rel (0) target = $region33
    $region32: #{tpu_custom_call.1} parent=1 // pred_region
      %1090 = dma.done [#allocation6], 32
    $region33: #{tpu_custom_call.1} parent=1 // pred_fallthru
      _
    %1091 = vsyncpa [#allocation5], 1
    %1092 = vsyncpa [#allocation6], 1

</llo_original>
